<compile_context>
chip_gen: v6e
topology: v6e:2x2x1
jax: 0.10.0
libtpu: 0.0.40
codegen_flags: <defaults>
</compile_context>

<pallas_src>
import functools

import jax
import jax.numpy as jnp
from jax.experimental import pallas as pl
from jax.experimental.pallas import tpu as pltpu


def _twin_q_kernel(s_ref, a_ref, w1s_ref, w1a_ref, b1_ref, w2_ref, b2_ref,
                   w3_ref, b3_ref, o_ref):
    """Fused twin-head MLP: 2 x (Linear+ReLU+Linear+ReLU+Linear) in one body."""
    cdt = w1s_ref.dtype                        # MXU operand dtype (bf16 default)
    s = s_ref[...].astype(cdt)                 # (TM, n_states)
    a = a_ref[...].astype(cdt)                 # (TM, n_actions)

    # Layer 1: split first matmul (concat folded in); both heads stacked on lanes.
    h1 = jnp.dot(s, w1s_ref[...], preferred_element_type=jnp.float32)
    h1 = h1 + jnp.dot(a, w1a_ref[...], preferred_element_type=jnp.float32)
    h1 = jnp.maximum(h1 + b1_ref[...], 0.0)                    # (TM, 2*Hp) f32

    # Layer 2: block-diagonal weights -> both heads in one MXU pass.
    h2 = jnp.dot(h1.astype(cdt), w2_ref[...],
                 preferred_element_type=jnp.float32)
    h2 = jnp.maximum(h2 + b2_ref[...], 0.0)                    # (TM, 2*Hp) f32

    # Layer 3: per-head dot with a length-Hp vector -> VPU mul + masked XLU
    # lane reductions (avoids a lane-sparse N=1 MXU matmul).
    t = h2 * w3_ref[...]                                       # (TM, 2*Hp) f32
    hp = t.shape[-1] // 2
    lane = jax.lax.broadcasted_iota(jnp.int32, t.shape, 1)
    q1 = jnp.sum(jnp.where(lane < hp, t, 0.0), axis=-1, keepdims=True)
    q2 = jnp.sum(jnp.where(lane >= hp, t, 0.0), axis=-1, keepdims=True)

    col = jax.lax.broadcasted_iota(jnp.int32, (t.shape[0], 2), 1)
    q = jnp.where(col == 0, q1 + b3_ref[0], q2 + b3_ref[1])    # (TM, 2)
    o_ref[...] = q.astype(o_ref.dtype)


@functools.partial(jax.jit, static_argnames=("block_rows",))
def _twin_q_pallas(state, action, w1s, w1a, b1, w2, b2, w3, b3, block_rows=512):
    """Batch-tiled fused twin-Q forward.  Returns (B, 2) = [Q1, Q2]."""
    b, s_dim = state.shape
    a_dim = action.shape[1]

    # Batch tile: large (>=512) for training batches, padded-to-8 for tiny ones.
    tm = block_rows if b >= block_rows else max(8, ((b + 7) // 8) * 8)
    b_pad = pl.cdiv(b, tm) * tm
    if b_pad != b:
        state = jnp.pad(state, ((0, b_pad - b), (0, 0)))
        action = jnp.pad(action, ((0, b_pad - b), (0, 0)))

    grid = (b_pad // tm,)
    resident = lambda shape: pl.BlockSpec(shape, lambda i: (0, 0))

    q = pl.pallas_call(
        _twin_q_kernel,
        out_shape=jax.ShapeDtypeStruct((b_pad, 2), jnp.float32),
        grid_spec=pltpu.PrefetchScalarGridSpec(
            num_scalar_prefetch=0,
            grid=grid,
            in_specs=[
                pl.BlockSpec((tm, s_dim), lambda i: (i, 0)),      # state tile
                pl.BlockSpec((tm, a_dim), lambda i: (i, 0)),      # action tile
                resident(w1s.shape),                              # VMEM-resident
                resident(w1a.shape),
                resident(b1.shape),
                resident(w2.shape),
                resident(b2.shape),
                resident(w3.shape),
                pl.BlockSpec(memory_space=pltpu.MemorySpace.SMEM),  # b3 scalars
            ],
            out_specs=pl.BlockSpec((tm, 2), lambda i: (i, 0)),
        ),
        compiler_params=pltpu.CompilerParams(
            dimension_semantics=("parallel",)),
    )(state, action, w1s, w1a, b1, w2, b2, w3, b3)
    return q[:b]


class CriticTwinPallas:
    """JAX/Pallas port of CriticTwin with both Q heads fused into one kernel."""

    def __init__(self, n_states, n_actions, hidden_units, key, *,
                 mxu_dtype=jnp.bfloat16, block_rows=512):
        self.block_rows = block_rows
        self.hidden = hidden_units
        # Pad each head's hidden dim so the stacked lane axis 2*Hp is a
        # multiple of 128 (full-width vregs / aligned MXU dims).
        hp = ((hidden_units + 63) // 64) * 64
        self.hp = hp

        d_in = n_states + n_actions
        ks = jax.random.split(key, 12)

        # reset_parameters() is not given in the spec; use PyTorch-default-style
        # uniform(-1/sqrt(fan_in), 1/sqrt(fan_in)) deterministic init.
        def linear_init(kw, kb, fan_in, fan_out):
            bound = 1.0 / float(fan_in) ** 0.5
            w = jax.random.uniform(kw, (fan_in, fan_out), jnp.float32,
                                   -bound, bound)
            b = jax.random.uniform(kb, (1, fan_out), jnp.float32, -bound, bound)
            return w, b

        heads = []
        for h in range(2):
            w1, b1 = linear_init(ks[6 * h + 0], ks[6 * h + 1], d_in, hidden_units)
            w2, b2 = linear_init(ks[6 * h + 2], ks[6 * h + 3], hidden_units,
                                 hidden_units)
            w3, b3 = linear_init(ks[6 * h + 4], ks[6 * h + 5], hidden_units, 1)
            heads.append((w1, b1, w2, b2, w3, b3))
        self.ref_params = tuple(heads)      # f32 per-head params (reference only)

        # ---- build fused / zero-padded parameters consumed by the kernel ----
        H = hidden_units
        d2 = 2 * hp
        w1s = jnp.zeros((n_states, d2), jnp.float32)
        w1a = jnp.zeros((n_actions, d2), jnp.float32)
        b1f = jnp.zeros((1, d2), jnp.float32)
        w2f = jnp.zeros((d2, d2), jnp.float32)
        b2f = jnp.zeros((1, d2), jnp.float32)
        w3f = jnp.zeros((1, d2), jnp.float32)
        b3f = jnp.zeros((2,), jnp.float32)
        for h, (w1, b1, w2, b2, w3, b3) in enumerate(heads):
            off = h * hp
            w1s = w1s.at[:, off:off + H].set(w1[:n_states])
            w1a = w1a.at[:, off:off + H].set(w1[n_states:])
            b1f = b1f.at[:, off:off + H].set(b1)
            w2f = w2f.at[off:off + H, off:off + H].set(w2)
            b2f = b2f.at[:, off:off + H].set(b2)
            w3f = w3f.at[0, off:off + H].set(w3[:, 0])
            b3f = b3f.at[h].set(b3[0, 0])

        # MXU operands stored in bf16 (f32 accumulate); VPU-side params stay f32.
        self.w1s = w1s.astype(mxu_dtype)
        self.w1a = w1a.astype(mxu_dtype)
        self.w2 = w2f.astype(mxu_dtype)
        self.b1 = b1f
        self.b2 = b2f
        self.w3 = w3f
        self.b3 = b3f

    def _twin_q(self, state, action):
        return _twin_q_pallas(state, action, self.w1s, self.w1a, self.b1,
                              self.w2, self.b2, self.w3, self.b3,
                              block_rows=self.block_rows)

    def forward(self, state, action):
        # Original module returns only Q1 here; Q2 comes for free in the fused pass.
        return self._twin_q(state, action)[:, 0:1]

    def get_double_q(self, state, action):
        q = self._twin_q(state, action)
        return q[:, 0:1], q[:, 1:2]


# ------------------------- references for self-checks -------------------------
def _reference_head_f32(state, action, params):
    """Original CriticTwin math in pure float32 (matches the PyTorch module)."""
    w1, b1, w2, b2, w3, b3 = params
    cat = jnp.concatenate((state, action), axis=-1)
    h1 = jnp.maximum(cat @ w1 + b1, 0.0)
    h2 = jnp.maximum(h1 @ w2 + b2, 0.0)
    return h2 @ w3 + b3


def _reference_fused(state, action, model):
    """Plain-JAX replica of the fused kernel math (same dtypes / padding)."""
    dt = model.w1s.dtype
    s = state.astype(dt)
    a = action.astype(dt)
    h1 = jnp.maximum(
        jnp.dot(s, model.w1s, preferred_element_type=jnp.float32)
        + jnp.dot(a, model.w1a, preferred_element_type=jnp.float32)
        + model.b1, 0.0)
    h2 = jnp.maximum(
        jnp.dot(h1.astype(dt), model.w2, preferred_element_type=jnp.float32)
        + model.b2, 0.0)
    t = h2 * model.w3
    hp = model.hp
    q1 = t[:, :hp].sum(-1, keepdims=True) + model.b3[0]
    q2 = t[:, hp:].sum(-1, keepdims=True) + model.b3[1]
    return q1, q2


if __name__ == "__main__":
    key = jax.random.PRNGKey(0)
    k_param, k_state, k_action = jax.random.split(key, 3)

    batch, n_states, n_actions, hidden = 8, 24, 8, 32
    model = CriticTwinPallas(n_states, n_actions, hidden, k_param)

    state = jax.random.normal(k_state, (batch, n_states), jnp.float32)
    action = jax.random.normal(k_action, (batch, n_actions), jnp.float32)

    q1 = model.forward(state, action)
    q1, q2 = jax.block_until_ready(model.get_double_q(state, action))
    assert q1.shape == (batch, 1) and q2.shape == (batch, 1)

    # (1) exact check against a plain-JAX replica of the fused (bf16-MXU) math.
    r1, r2 = _reference_fused(state, action, model)
    assert jnp.allclose(q1, r1, atol=1e-4, rtol=1e-4)
    assert jnp.allclose(q2, r2, atol=1e-4, rtol=1e-4)

    # (2) semantics check against the original float32 CriticTwin math
    #     (loose tolerance only because MXU operands are bf16; accum is f32).
    f1 = _reference_head_f32(state, action, model.ref_params[0])
    f2 = _reference_head_f32(state, action, model.ref_params[1])
    assert jnp.allclose(q1, f1, atol=2e-2, rtol=2e-2)
    assert jnp.allclose(q2, f2, atol=2e-2, rtol=2e-2)

    # (3) exercise the batch-tiled path (grid > 1, padded tail rows, resident weights).
    kbs, kba = jax.random.split(jax.random.PRNGKey(1))
    big_b = 600
    big_state = jax.random.normal(kbs, (big_b, n_states), jnp.float32)
    big_action = jax.random.normal(kba, (big_b, n_actions), jnp.float32)
    bq1, bq2 = jax.block_until_ready(model.get_double_q(big_state, big_action))
    br1, br2 = _reference_fused(big_state, big_action, model)
    assert bq1.shape == (big_b, 1) and bq2.shape == (big_b, 1)
    assert jnp.allclose(bq1, br1, atol=1e-4, rtol=1e-4)
    assert jnp.allclose(bq2, br2, atol=1e-4, rtol=1e-4)

    print("KERNEL_OK")
</pallas_src>

<mosaic_0001>
module attributes {stable_mosaic.version = 11 : i64} {
  func.func @_twin_q_kernel(%arg0: i32, %arg1: memref<8x24xf32, #tpu.memory_space<vmem>>, %arg2: memref<8x8xf32, #tpu.memory_space<vmem>>, %arg3: memref<24x128xbf16, #tpu.memory_space<vmem>>, %arg4: memref<8x128xbf16, #tpu.memory_space<vmem>>, %arg5: memref<1x128xf32, #tpu.memory_space<vmem>>, %arg6: memref<128x128xbf16, #tpu.memory_space<vmem>>, %arg7: memref<1x128xf32, #tpu.memory_space<vmem>>, %arg8: memref<1x128xf32, #tpu.memory_space<vmem>>, %arg9: memref<2xf32, #tpu.memory_space<smem>>, %arg10: memref<8x2xf32, #tpu.memory_space<vmem>>) attributes {dimension_semantics = [#tpu.dimension_semantics<parallel>], iteration_bounds = array<i64: 1>, scalar_prefetch = 0 : i64, scratch_operands = 0 : i64, tpu.core_type = #tpu.core_type<tc>, window_params = [{transform_indices = @transform_0, window_bounds = array<i64: 8, 24>}, {transform_indices = @transform_1, window_bounds = array<i64: 8, 8>}, {pipeline_mode = #tpu.pipeline_mode<synchronous>, transform_indices = @transform_2, window_bounds = array<i64: 24, 128>}, {pipeline_mode = #tpu.pipeline_mode<synchronous>, transform_indices = @transform_3, window_bounds = array<i64: 8, 128>}, {pipeline_mode = #tpu.pipeline_mode<synchronous>, transform_indices = @transform_4, window_bounds = array<i64: 1, 128>}, {pipeline_mode = #tpu.pipeline_mode<synchronous>, transform_indices = @transform_5, window_bounds = array<i64: 128, 128>}, {pipeline_mode = #tpu.pipeline_mode<synchronous>, transform_indices = @transform_6, window_bounds = array<i64: 1, 128>}, {pipeline_mode = #tpu.pipeline_mode<synchronous>, transform_indices = @transform_7, window_bounds = array<i64: 1, 128>}, {transform_indices = @transform_8, window_bounds = array<i64: 2>}, {transform_indices = @transform_9, window_bounds = array<i64: 8, 2>}]} {
    %c0 = arith.constant 0 : index
    %c0_0 = arith.constant 0 : index
    %0 = vector.load %arg1[%c0, %c0_0] : memref<8x24xf32, #tpu.memory_space<vmem>>, vector<8x24xf32>
    %1 = arith.truncf %0 : vector<8x24xf32> to vector<8x24xbf16>
    %c0_1 = arith.constant 0 : index
    %c0_2 = arith.constant 0 : index
    %2 = vector.load %arg2[%c0_1, %c0_2] : memref<8x8xf32, #tpu.memory_space<vmem>>, vector<8x8xf32>
    %3 = arith.truncf %2 : vector<8x8xf32> to vector<8x8xbf16>
    %c0_3 = arith.constant 0 : index
    %c0_4 = arith.constant 0 : index
    %4 = vector.load %arg3[%c0_3, %c0_4] : memref<24x128xbf16, #tpu.memory_space<vmem>>, vector<24x128xbf16>
    %cst = arith.constant dense<0.000000e+00> : vector<8x128xf32>
    %5 = tpu.matmul %1, %4, %cst {dimension_numbers = #tpu.dot_dimension_numbers<[1], [0], [0], [1], [0, 0, 1, 1], [], []>} : vector<8x24xbf16>, vector<24x128xbf16>, vector<8x128xf32> -> vector<8x128xf32>
    %c0_5 = arith.constant 0 : index
    %c0_6 = arith.constant 0 : index
    %6 = vector.load %arg4[%c0_5, %c0_6] : memref<8x128xbf16, #tpu.memory_space<vmem>>, vector<8x128xbf16>
    %cst_7 = arith.constant dense<0.000000e+00> : vector<8x128xf32>
    %7 = tpu.matmul %3, %6, %cst_7 {dimension_numbers = #tpu.dot_dimension_numbers<[1], [0], [0], [1], [0, 0, 1, 1], [], []>} : vector<8x8xbf16>, vector<8x128xbf16>, vector<8x128xf32> -> vector<8x128xf32>
    %8 = arith.addf %5, %7 : vector<8x128xf32>
    %c0_8 = arith.constant 0 : index
    %c0_9 = arith.constant 0 : index
    %9 = vector.load %arg5[%c0_8, %c0_9] : memref<1x128xf32, #tpu.memory_space<vmem>>, vector<1x128xf32>
    %10 = vector.broadcast %9 : vector<1x128xf32> to vector<8x128xf32>
    %11 = arith.addf %8, %10 : vector<8x128xf32>
    %cst_10 = arith.constant 0.000000e+00 : f32
    %12 = vector.broadcast %cst_10 : f32 to vector<8x128xf32>
    %13 = arith.maximumf %11, %12 : vector<8x128xf32>
    %14 = arith.truncf %13 : vector<8x128xf32> to vector<8x128xbf16>
    %c0_11 = arith.constant 0 : index
    %c0_12 = arith.constant 0 : index
    %15 = vector.load %arg6[%c0_11, %c0_12] : memref<128x128xbf16, #tpu.memory_space<vmem>>, vector<128x128xbf16>
    %cst_13 = arith.constant dense<0.000000e+00> : vector<8x128xf32>
    %16 = tpu.matmul %14, %15, %cst_13 {dimension_numbers = #tpu.dot_dimension_numbers<[1], [0], [0], [1], [0, 0, 1, 1], [], []>} : vector<8x128xbf16>, vector<128x128xbf16>, vector<8x128xf32> -> vector<8x128xf32>
    %c0_14 = arith.constant 0 : index
    %c0_15 = arith.constant 0 : index
    %17 = vector.load %arg7[%c0_14, %c0_15] : memref<1x128xf32, #tpu.memory_space<vmem>>, vector<1x128xf32>
    %18 = vector.broadcast %17 : vector<1x128xf32> to vector<8x128xf32>
    %19 = arith.addf %16, %18 : vector<8x128xf32>
    %cst_16 = arith.constant 0.000000e+00 : f32
    %20 = vector.broadcast %cst_16 : f32 to vector<8x128xf32>
    %21 = arith.maximumf %19, %20 : vector<8x128xf32>
    %c0_17 = arith.constant 0 : index
    %c0_18 = arith.constant 0 : index
    %22 = vector.load %arg8[%c0_17, %c0_18] : memref<1x128xf32, #tpu.memory_space<vmem>>, vector<1x128xf32>
    %23 = vector.broadcast %22 : vector<1x128xf32> to vector<8x128xf32>
    %24 = arith.mulf %21, %23 : vector<8x128xf32>
    %25 = tpu.iota {dimensions = array<i32: 1>} : vector<8x128xi32>
    %c64_i32 = arith.constant 64 : i32
    %26 = vector.broadcast %c64_i32 : i32 to vector<8x128xi32>
    %27 = arith.cmpi slt, %25, %26 : vector<8x128xi32>
    %cst_19 = arith.constant 0.000000e+00 : f32
    %28 = vector.broadcast %cst_19 : f32 to vector<8x128xf32>
    %29 = arith.select %27, %24, %28 : vector<8x128xi1>, vector<8x128xf32>
    %cst_20 = arith.constant dense<0.000000e+00> : vector<8xf32>
    %30 = vector.multi_reduction <add>, %29, %cst_20 [1] : vector<8x128xf32> to vector<8xf32>
    %31 = vector.shape_cast %30 : vector<8xf32> to vector<8x1xf32>
    %c64_i32_21 = arith.constant 64 : i32
    %32 = vector.broadcast %c64_i32_21 : i32 to vector<8x128xi32>
    %33 = arith.cmpi sge, %25, %32 : vector<8x128xi32>
    %cst_22 = arith.constant 0.000000e+00 : f32
    %34 = vector.broadcast %cst_22 : f32 to vector<8x128xf32>
    %35 = arith.select %33, %24, %34 : vector<8x128xi1>, vector<8x128xf32>
    %cst_23 = arith.constant dense<0.000000e+00> : vector<8xf32>
    %36 = vector.multi_reduction <add>, %35, %cst_23 [1] : vector<8x128xf32> to vector<8xf32>
    %37 = vector.shape_cast %36 : vector<8xf32> to vector<8x1xf32>
    %38 = tpu.iota {dimensions = array<i32: 1>} : vector<8x2xi32>
    %c0_i32 = arith.constant 0 : i32
    %39 = vector.broadcast %c0_i32 : i32 to vector<8x2xi32>
    %40 = arith.cmpi eq, %38, %39 : vector<8x2xi32>
    %c0_24 = arith.constant 0 : index
    %41 = memref.load %arg9[%c0_24] : memref<2xf32, #tpu.memory_space<smem>>
    %42 = vector.broadcast %41 : f32 to vector<8x1xf32>
    %43 = arith.addf %31, %42 : vector<8x1xf32>
    %c1 = arith.constant 1 : index
    %44 = memref.load %arg9[%c1] : memref<2xf32, #tpu.memory_space<smem>>
    %45 = vector.broadcast %44 : f32 to vector<8x1xf32>
    %46 = arith.addf %37, %45 : vector<8x1xf32>
    %47 = vector.shape_cast %43 : vector<8x1xf32> to vector<8x1xf32>
    %48 = vector.broadcast %47 : vector<8x1xf32> to vector<8x2xf32>
    %49 = vector.shape_cast %46 : vector<8x1xf32> to vector<8x1xf32>
    %50 = vector.broadcast %49 : vector<8x1xf32> to vector<8x2xf32>
    %51 = arith.select %40, %48, %50 : vector<8x2xi1>, vector<8x2xf32>
    %c0_25 = arith.constant 0 : index
    %c0_26 = arith.constant 0 : index
    %52 = vector.load %arg10[%c0_25, %c0_26] : memref<8x2xf32, #tpu.memory_space<vmem>>, vector<8x2xf32>
    tpu.vector_store %arg10[%c0_25, %c0_26], %51 {strides = array<i32>} : memref<8x2xf32, #tpu.memory_space<vmem>>, vector<8x2xf32>,
    return
  }
  func.func @transform_0(%arg0: i32) -> (i32, i32) {
    %c0_i32 = arith.constant 0 : i32
    %c0_i32_0 = arith.constant 0 : i32
    return %arg0, %c0_i32 : i32, i32
  }
  func.func @transform_1(%arg0: i32) -> (i32, i32) {
    %c0_i32 = arith.constant 0 : i32
    %c0_i32_0 = arith.constant 0 : i32
    return %arg0, %c0_i32 : i32, i32
  }
  func.func @transform_2(%arg0: i32) -> (i32, i32) {
    %c0_i32 = arith.constant 0 : i32
    %c0_i32_0 = arith.constant 0 : i32
    %c0_i32_1 = arith.constant 0 : i32
    return %c0_i32, %c0_i32_0 : i32, i32
  }
  func.func @transform_3(%arg0: i32) -> (i32, i32) {
    %c0_i32 = arith.constant 0 : i32
    %c0_i32_0 = arith.constant 0 : i32
    %c0_i32_1 = arith.constant 0 : i32
    return %c0_i32, %c0_i32_0 : i32, i32
  }
  func.func @transform_4(%arg0: i32) -> (i32, i32) {
    %c0_i32 = arith.constant 0 : i32
    %c0_i32_0 = arith.constant 0 : i32
    %c0_i32_1 = arith.constant 0 : i32
    return %c0_i32, %c0_i32_0 : i32, i32
  }
  func.func @transform_5(%arg0: i32) -> (i32, i32) {
    %c0_i32 = arith.constant 0 : i32
    %c0_i32_0 = arith.constant 0 : i32
    %c0_i32_1 = arith.constant 0 : i32
    return %c0_i32, %c0_i32_0 : i32, i32
  }
  func.func @transform_6(%arg0: i32) -> (i32, i32) {
    %c0_i32 = arith.constant 0 : i32
    %c0_i32_0 = arith.constant 0 : i32
    %c0_i32_1 = arith.constant 0 : i32
    return %c0_i32, %c0_i32_0 : i32, i32
  }
  func.func @transform_7(%arg0: i32) -> (i32, i32) {
    %c0_i32 = arith.constant 0 : i32
    %c0_i32_0 = arith.constant 0 : i32
    %c0_i32_1 = arith.constant 0 : i32
    return %c0_i32, %c0_i32_0 : i32, i32
  }
  func.func @transform_8(%arg0: i32) -> i32 {
    %c0_i32 = arith.constant 0 : i32
    %c0_i32_0 = arith.constant 0 : i32
    return %c0_i32 : i32
  }
  func.func @transform_9(%arg0: i32) -> (i32, i32) {
    %c0_i32 = arith.constant 0 : i32
    %c0_i32_0 = arith.constant 0 : i32
    return %arg0, %c0_i32 : i32, i32
  }
}

</mosaic_0001>

<llo_original>
// kernel: _twin_q_pallas.1
$region0: #{_twin_q_pallas.1}
  #allocation0 [shape = 'u32[]', space=smem, size = 0x4, offset = 0x4, fixed_abs, tag = 'smem constant byte address 0x4 - core index']
  #allocation1 [shape = 'u32[144,128]{1,0:T(1,128)}', space=vmem, size = 0x12000, scoped, tag = 'internal scratch']
  %s0 = inlined_call_operand.hbm [shape: f32[8,24], index: 0, kind: input, shape index: {}]
  %s1 = inlined_call_operand.hbm [shape: f32[8,8], index: 1, kind: input, shape index: {}]
  %s2 = inlined_call_operand.hbm [shape: bf16[24,128], index: 2, kind: input, shape index: {}]
  %s3 = inlined_call_operand.vmem [shape: bf16[8,128], index: 3, kind: input, shape index: {}]
  %s4 = inlined_call_operand.vmem [shape: f32[1,128], index: 4, kind: input, shape index: {}]
  %s5 = inlined_call_operand.hbm [shape: bf16[128,128], index: 5, kind: input, shape index: {}]
  %s6 = inlined_call_operand.vmem [shape: f32[1,128], index: 6, kind: input, shape index: {}]
  %s7 = inlined_call_operand.vmem [shape: f32[1,128], index: 7, kind: input, shape index: {}]
  %s8 = inlined_call_operand.vmem [shape: f32[2], index: 8, kind: input, shape index: {}]
  %s9 = inlined_call_operand.vmem [shape: f32[8,2], index: 9, kind: output, shape index: {}]
  %s10 = sld [smem:[#allocation0]]
  $region66: #{_twin_q_pallas.1} parent=0
    _
  %s12 = ssub.s32 1, %s10
  %s13 = scalar_select 0, %s12, %s10
  $region1: #{_twin_q_pallas.1} parent=0
    #allocation2 [shape = 'u8[4096]{0}', space=vmem, size = 0x1000, scoped, tag = 'input window, operand 0, single buffered']
    #allocation3 [shape = 's32[1]{0}', space=sflag, size = 0x4, scoped, tag = 'scoped memory for _twin_q_pallas.1']
    #allocation4 [shape = 's32[1]{0}', space=sflag, size = 0x4, scoped, tag = 'scoped memory for _twin_q_pallas.1']
    #allocation5 [shape = 'u8[4096]{0}', space=vmem, size = 0x1000, scoped, tag = 'input window, operand 1, single buffered']
    #allocation6 [shape = 's32[1]{0}', space=sflag, size = 0x4, scoped, tag = 'scoped memory for _twin_q_pallas.1']
    #allocation7 [shape = 'u8[6144]{0}', space=vmem, size = 0x1800, scoped, tag = 'input window, operand 2, single buffered']
    #allocation8 [shape = 'u8[32768]{0}', space=vmem, size = 0x8000, scoped, tag = 'input window, operand 5, single buffered']
    #allocation9 [shape = 's32[1]{0}', space=sflag, size = 0x4, scoped, tag = 'scoped memory for _twin_q_pallas.1']
    #allocation10 [shape = 'u8[512]{0}', space=smem, size = 0x200, scoped, tag = 'input window, operand 8, single buffered']
    %14 = vsyncpa [#allocation3], 0
    %15 = vsyncpa [#allocation6], 0
    %16 = vsyncpa [#allocation9], 0
    %17 = vsyncpa [#allocation4], 0
    // Predicated region
    $region2: #{_twin_q_pallas.1} parent=1 // pred_check
      _
    $region3: #{_twin_q_pallas.1} parent=1 // pred_check_branch
      %19 = sbr.rel (0) target = $region5
    $region4: #{_twin_q_pallas.1} parent=1 // pred_region
      %s21 = ssub.s32 128, 128
      %22 = vsyncadd [#allocation3], %s21
      %s24 = sshll.u32 [#allocation2], 4
      %s25 = int_to_ptr.vmem [resolvable:$true] %s24
      %27 = dma.hbm_to_vmem [thread:$0]  %s0, 128, %s25, [#allocation3]
    $region5: #{_twin_q_pallas.1} parent=1 // pred_fallthru
      _
    // Predicated region
    $region6: #{_twin_q_pallas.1} parent=1 // pred_check
      _
    $region7: #{_twin_q_pallas.1} parent=1 // pred_check_branch
      %29 = sbr.rel (0) target = $region9
    $region8: #{_twin_q_pallas.1} parent=1 // pred_region
      %s31 = ssub.s32 128, 128
      %32 = vsyncadd [#allocation6], %s31
      %s34 = sshll.u32 [#allocation5], 4
      %s35 = int_to_ptr.vmem [resolvable:$true] %s34
      %37 = dma.hbm_to_vmem [thread:$0]  %s1, 128, %s35, [#allocation6]
    $region9: #{_twin_q_pallas.1} parent=1 // pred_fallthru
      _
    // Predicated region
    $region10: #{_twin_q_pallas.1} parent=1 // pred_check
      _
    $region11: #{_twin_q_pallas.1} parent=1 // pred_check_branch
      %39 = sbr.rel (0) target = $region13
    $region12: #{_twin_q_pallas.1} parent=1 // pred_region
      %s41 = ssub.s32 192, 192
      %42 = vsyncadd [#allocation6], %s41
      %s43 = sshll.u32 [#allocation7], 4
      %s44 = int_to_ptr.vmem [resolvable:$true] %s43
      %49 = dma.hbm_to_vmem [thread:$0]  %s2, 192, %s44, [#allocation6], 64, 64, 4
    $region13: #{_twin_q_pallas.1} parent=1 // pred_fallthru
      _
    // Predicated region
    $region14: #{_twin_q_pallas.1} parent=1 // pred_check
      _
    $region15: #{_twin_q_pallas.1} parent=1 // pred_check_branch
      %51 = sbr.rel (0) target = $region17
    $region16: #{_twin_q_pallas.1} parent=1 // pred_region
      _
    $region17: #{_twin_q_pallas.1} parent=1 // pred_fallthru
      _
    // Predicated region
    $region18: #{_twin_q_pallas.1} parent=1 // pred_check
      _
    $region19: #{_twin_q_pallas.1} parent=1 // pred_check_branch
      %53 = sbr.rel (0) target = $region21
    $region20: #{_twin_q_pallas.1} parent=1 // pred_region
      _
    $region21: #{_twin_q_pallas.1} parent=1 // pred_fallthru
      _
    // Predicated region
    $region22: #{_twin_q_pallas.1} parent=1 // pred_check
      _
    $region23: #{_twin_q_pallas.1} parent=1 // pred_check_branch
      %55 = sbr.rel (0) target = $region25
    $region24: #{_twin_q_pallas.1} parent=1 // pred_region
      %s57 = ssub.s32 1024, 1024
      %58 = vsyncadd [#allocation9], %s57
      %s59 = sshll.u32 [#allocation8], 4
      %s60 = int_to_ptr.vmem [resolvable:$true] %s59
      %65 = dma.hbm_to_vmem [thread:$0]  %s5, 1024, %s60, [#allocation9], 64, 64, 4
    $region25: #{_twin_q_pallas.1} parent=1 // pred_fallthru
      _
    // Predicated region
    $region26: #{_twin_q_pallas.1} parent=1 // pred_check
      _
    $region27: #{_twin_q_pallas.1} parent=1 // pred_check_branch
      %67 = sbr.rel (0) target = $region29
    $region28: #{_twin_q_pallas.1} parent=1 // pred_region
      _
    $region29: #{_twin_q_pallas.1} parent=1 // pred_fallthru
      _
    // Predicated region
    $region30: #{_twin_q_pallas.1} parent=1 // pred_check
      _
    $region31: #{_twin_q_pallas.1} parent=1 // pred_check_branch
      %69 = sbr.rel (0) target = $region33
    $region32: #{_twin_q_pallas.1} parent=1 // pred_region
      _
    $region33: #{_twin_q_pallas.1} parent=1 // pred_fallthru
      _
    // Predicated region
    $region34: #{_twin_q_pallas.1} parent=1 // pred_check
      _
    $region35: #{_twin_q_pallas.1} parent=1 // pred_check_branch
      %71 = sbr.rel (0) target = $region37
    $region36: #{_twin_q_pallas.1} parent=1 // pred_region
      %s73 = ssub.s32 16, 16
      %74 = vsyncadd [#allocation4], %s73
      %s76 = sshll.u32 %s8, 4
      %s77 = int_to_ptr.vmem [resolvable:$true] %s76
      %79 = dma.vmem_to_smem %s77, 16, [#allocation10], [#allocation4]
    $region37: #{_twin_q_pallas.1} parent=1 // pred_fallthru
      _
    // Predicated region
    $region38: #{_twin_q_pallas.1} parent=1 // pred_check
      _
    $region39: #{_twin_q_pallas.1} parent=1 // pred_check_branch
      %81 = sbr.rel (0) target = $region41
    $region40: #{_twin_q_pallas.1} parent=1 // pred_region
      %82 = dma.done [#allocation3], 128
    $region41: #{_twin_q_pallas.1} parent=1 // pred_fallthru
      _
    // Predicated region
    $region42: #{_twin_q_pallas.1} parent=1 // pred_check
      _
    $region43: #{_twin_q_pallas.1} parent=1 // pred_check_branch
      %84 = sbr.rel (0) target = $region45
    $region44: #{_twin_q_pallas.1} parent=1 // pred_region
      %85 = dma.done [#allocation6], 128
    $region45: #{_twin_q_pallas.1} parent=1 // pred_fallthru
      _
    // Predicated region
    $region46: #{_twin_q_pallas.1} parent=1 // pred_check
      _
    $region47: #{_twin_q_pallas.1} parent=1 // pred_check_branch
      %87 = sbr.rel (0) target = $region49
    $region48: #{_twin_q_pallas.1} parent=1 // pred_region
      %88 = dma.done [#allocation6], 192
    $region49: #{_twin_q_pallas.1} parent=1 // pred_fallthru
      _
    // Predicated region
    $region50: #{_twin_q_pallas.1} parent=1 // pred_check
      _
    $region51: #{_twin_q_pallas.1} parent=1 // pred_check_branch
      %90 = sbr.rel (0) target = $region53
    $region52: #{_twin_q_pallas.1} parent=1 // pred_region
      %91 = dma.done [#allocation9], 1024
    $region53: #{_twin_q_pallas.1} parent=1 // pred_fallthru
      _
    // Predicated region
    $region54: #{_twin_q_pallas.1} parent=1 // pred_check
      _
    $region55: #{_twin_q_pallas.1} parent=1 // pred_check_branch
      %93 = sbr.rel (0) target = $region57
    $region56: #{_twin_q_pallas.1} parent=1 // pred_region
      %94 = dma.done [#allocation4], 16
    $region57: #{_twin_q_pallas.1} parent=1 // pred_fallthru
      _
    %95 = sfence
    %v97 = vld [vmem:[#allocation2] sm:$0xff]
    %v98 = vpack.c.bf16 %v97, %v97
    %v99 = vld [vmem:[#allocation5] sm:$0xff]
    %v100 = vpack.c.bf16 %v99, %v99
    %v101 = vld [vmem:[#allocation7] sm:$0xf]
    %v102 = vld [vmem:[#allocation7 + $0x4] sm:$0xf]
    %v103 = vld [vmem:[#allocation7 + $0x8] sm:$0xf]
    %v104 = vld [vmem:[%s3] sm:$0xf]
    %vm105 = vcmask 64512
    %v107 = vsel %vm105, %v100, 0
    %vm109 = vcmask 1043456
    %v111 = vsel %vm109, %v104, 0
    %113 = vmatprep.subr.bf16.mxu0 0
    %114 = vmatpush1.bf16.msra.mxu0 0
    %115 = vmatprep.subr.bf16.mxu0 0
    %116 = vmatpush1.bf16.msra.mxu0 0
    %117 = vmatprep.subr.bf16.mxu0 0
    %118 = vmatpush1.bf16.msra.mxu0 0
    %119 = vmatprep.subr.bf16.mxu0 0
    %120 = vmatpush1.bf16.msra.mxu0 0
    %121 = vmatprep.subr.bf16.mxu0 0
    %122 = vmatpush1.bf16.msra.mxu0 0
    %123 = vmatprep.subr.bf16.mxu0 0
    %124 = vmatpush1.bf16.msra.mxu0 0
    %125 = vmatprep.subr.bf16.mxu0 0
    %126 = vmatpush1.bf16.msra.mxu0 0
    %127 = vmatprep.subr.bf16.mxu0 0
    %128 = vmatpush1.bf16.msra.mxu0 %v111
    %129 = vmatprep.subr.bf16.mxu0 0
    %130 = vmatpush2.bf16.msra.mxu0 0
    %131 = vmatprep.subr.bf16.mxu0 0
    %132 = vmatpush2.bf16.msra.mxu0 0
    %133 = vmatprep.subr.bf16.mxu0 0
    %134 = vmatpush2.bf16.msra.mxu0 0
    %135 = vmatprep.subr.bf16.mxu0 0
    %136 = vmatpush2.bf16.msra.mxu0 0
    %137 = vmatprep.subr.bf16.mxu0 0
    %138 = vmatpush2.bf16.msra.mxu0 0
    %139 = vmatprep.subr.bf16.mxu0 0
    %140 = vmatpush2.bf16.msra.mxu0 0
    %141 = vmatprep.subr.bf16.mxu0 0
    %142 = vmatpush2.bf16.msra.mxu0 0
    %143 = vmatprep.subr.bf16.mxu0 0
    %144 = vmatpush2.bf16.msra.mxu0 0
    %145 = vmatprep.mubr.bf16.mxu0 0
    %146 = vmatmul.mubr.bf16.gmra.mxu0 %v107
    %v147 = vpop.f32.mrf.mxu0
    %v148 = vadd.f32 0.0, %v147
    %v149 = vpop.f32.mrf.mxu0
    %v150 = vpop.f32.mrf.mxu0
    %v151 = vpop.f32.mrf.mxu0
    %152 = vdwg.mxu0
    %v156 = vunpack.c.l.b16 %v101
    %v157 = vunpack.c.l.b16 %v102
    %v158 = vunpack.c.l.b16 %v103
    %v159 = vpack.c.b16 %v157, %v156
    %v160 = vpack.c.b16 %v158, %v158
    %vm162 = vcmask 195584
    %v164 = vsel %vm162, %v98, 0
    %v167 = vsel %vm109, %v160, 0
    %169 = vmatprep.subr.bf16.mxu0 0
    %170 = vmatpush1.bf16.msra.mxu0 0
    %171 = vmatprep.subr.bf16.mxu0 0
    %172 = vmatpush1.bf16.msra.mxu0 0
    %173 = vmatprep.subr.bf16.mxu0 0
    %174 = vmatpush1.bf16.msra.mxu0 0
    %175 = vmatprep.subr.bf16.mxu0 0
    %176 = vmatpush1.bf16.msra.mxu0 0
    %177 = vmatprep.subr.bf16.mxu0 0
    %178 = vmatpush1.bf16.msra.mxu0 0
    %179 = vmatprep.subr.bf16.mxu0 0
    %180 = vmatpush1.bf16.msra.mxu0 0
    %181 = vmatprep.subr.bf16.mxu0 0
    %182 = vmatpush1.bf16.msra.mxu0 %v167
    %183 = vmatprep.subr.bf16.mxu0 0
    %184 = vmatpush1.bf16.msra.mxu0 %v159
    %185 = vmatprep.subr.bf16.mxu0 0
    %186 = vmatpush2.bf16.msra.mxu0 0
    %187 = vmatprep.subr.bf16.mxu0 0
    %188 = vmatpush2.bf16.msra.mxu0 0
    %189 = vmatprep.subr.bf16.mxu0 0
    %190 = vmatpush2.bf16.msra.mxu0 0
    %191 = vmatprep.subr.bf16.mxu0 0
    %192 = vmatpush2.bf16.msra.mxu0 0
    %193 = vmatprep.subr.bf16.mxu0 0
    %194 = vmatpush2.bf16.msra.mxu0 0
    %195 = vmatprep.subr.bf16.mxu0 0
    %196 = vmatpush2.bf16.msra.mxu0 0
    %197 = vmatprep.subr.bf16.mxu0 0
    %198 = vmatpush2.bf16.msra.mxu0 0
    %199 = vmatprep.subr.bf16.mxu0 0
    %200 = vmatpush2.bf16.msra.mxu0 0
    %201 = vmatprep.mubr.bf16.mxu0 0
    %202 = vmatmul.mubr.bf16.gmra.mxu0 %v164
    %v203 = vpop.f32.mrf.mxu0
    %v204 = vadd.f32 %v148, %v203
    %v205 = vpop.f32.mrf.mxu0
    %v206 = vpop.f32.mrf.mxu0
    %v207 = vpop.f32.mrf.mxu0
    %208 = vdwg.mxu0
    %v209 = vld [vmem:[%s4] sm:$0x1]
    %v211 = vlaneseq
    %v212 = vshrl.u32 %v211, 7
    %v213 = vsub.s32 0, %v212
    %v214 = vrot.slane %v209, %v213
    %v216 = vadd.f32 %v204, %v214
    %v217 = vmax.f32 %v216, 0.0
    %v218 = vpack.c.bf16 %v217, %v217
    %v219 = vld [vmem:[#allocation8] sm:$0xf]
    %v220 = vld [vmem:[#allocation8 + $0x4] sm:$0xf]
    %v221 = vld [vmem:[#allocation8 + $0x8] sm:$0xf]
    %v222 = vld [vmem:[#allocation8 + $0xc] sm:$0xf]
    %v223 = vld [vmem:[#allocation8 + $0x10] sm:$0xf]
    %v224 = vld [vmem:[#allocation8 + $0x14] sm:$0xf]
    %v225 = vld [vmem:[#allocation8 + $0x18] sm:$0xf]
    %v226 = vld [vmem:[#allocation8 + $0x1c] sm:$0xf]
    %v227 = vld [vmem:[#allocation8 + $0x20] sm:$0xf]
    %v228 = vld [vmem:[#allocation8 + $0x24] sm:$0xf]
    %v229 = vld [vmem:[#allocation8 + $0x28] sm:$0xf]
    %v230 = vld [vmem:[#allocation8 + $0x2c] sm:$0xf]
    %v231 = vld [vmem:[#allocation8 + $0x30] sm:$0xf]
    %v232 = vld [vmem:[#allocation8 + $0x34] sm:$0xf]
    %v233 = vld [vmem:[#allocation8 + $0x38] sm:$0xf]
    %v234 = vld [vmem:[#allocation8 + $0x3c] sm:$0xf]
    %v235 = vld [vmem:[%s6] sm:$0x1]
    %v237 = vlaneseq
    %v238 = vshrl.u32 %v237, 7
    %v239 = vsub.s32 0, %v238
    %v240 = vrot.slane %v235, %v239
    %v258 = vunpack.c.l.b16 %v219
    %v259 = vunpack.c.l.b16 %v220
    %v260 = vunpack.c.l.b16 %v221
    %v261 = vunpack.c.l.b16 %v222
    %v262 = vunpack.c.l.b16 %v223
    %v263 = vunpack.c.l.b16 %v224
    %v264 = vunpack.c.l.b16 %v225
    %v265 = vunpack.c.l.b16 %v226
    %v266 = vunpack.c.l.b16 %v227
    %v267 = vunpack.c.l.b16 %v228
    %v268 = vunpack.c.l.b16 %v229
    %v269 = vunpack.c.l.b16 %v230
    %v270 = vunpack.c.l.b16 %v231
    %v271 = vunpack.c.l.b16 %v232
    %v272 = vunpack.c.l.b16 %v233
    %v273 = vunpack.c.l.b16 %v234
    %v274 = vpack.c.b16 %v259, %v258
    %v275 = vpack.c.b16 %v261, %v260
    %v276 = vpack.c.b16 %v263, %v262
    %v277 = vpack.c.b16 %v265, %v264
    %v278 = vpack.c.b16 %v267, %v266
    %v279 = vpack.c.b16 %v269, %v268
    %v280 = vpack.c.b16 %v271, %v270
    %v281 = vpack.c.b16 %v273, %v272
    %290 = vmatprep.subr.bf16.mxu0 0
    %291 = vmatpush1.bf16.msra.mxu0 %v281
    %292 = vmatprep.subr.bf16.mxu0 0
    %293 = vmatpush1.bf16.msra.mxu0 %v280
    %294 = vmatprep.subr.bf16.mxu0 0
    %295 = vmatpush1.bf16.msra.mxu0 %v279
    %296 = vmatprep.subr.bf16.mxu0 0
    %297 = vmatpush1.bf16.msra.mxu0 %v278
    %298 = vmatprep.subr.bf16.mxu0 0
    %299 = vmatpush1.bf16.msra.mxu0 %v277
    %300 = vmatprep.subr.bf16.mxu0 0
    %301 = vmatpush1.bf16.msra.mxu0 %v276
    %302 = vmatprep.subr.bf16.mxu0 0
    %303 = vmatpush1.bf16.msra.mxu0 %v275
    %304 = vmatprep.subr.bf16.mxu0 0
    %305 = vmatpush1.bf16.msra.mxu0 %v274
    %306 = vmatprep.subr.bf16.mxu0 0
    %307 = vmatpush2.bf16.msra.mxu0 0
    %308 = vmatprep.subr.bf16.mxu0 0
    %309 = vmatpush2.bf16.msra.mxu0 0
    %310 = vmatprep.subr.bf16.mxu0 0
    %311 = vmatpush2.bf16.msra.mxu0 0
    %312 = vmatprep.subr.bf16.mxu0 0
    %313 = vmatpush2.bf16.msra.mxu0 0
    %314 = vmatprep.subr.bf16.mxu0 0
    %315 = vmatpush2.bf16.msra.mxu0 0
    %316 = vmatprep.subr.bf16.mxu0 0
    %317 = vmatpush2.bf16.msra.mxu0 0
    %318 = vmatprep.subr.bf16.mxu0 0
    %319 = vmatpush2.bf16.msra.mxu0 0
    %320 = vmatprep.subr.bf16.mxu0 0
    %321 = vmatpush2.bf16.msra.mxu0 0
    %322 = vmatprep.mubr.bf16.mxu0 0
    %323 = vmatmul.mubr.bf16.gmra.mxu0 %v218
    %v324 = vpop.f32.mrf.mxu0
    %v325 = vadd.f32 %v240, %v324
    %v326 = vpop.f32.mrf.mxu0
    %v327 = vpop.f32.mrf.mxu0
    %v328 = vpop.f32.mrf.mxu0
    %329 = vdwg.mxu0
    %v330 = vmax.f32 %v325, 0.0
    %v331 = vld [vmem:[%s7] sm:$0x1]
    %v333 = vlaneseq
    %v334 = vshrl.u32 %v333, 7
    %v335 = vsub.s32 0, %v334
    %v336 = vrot.slane %v331, %v335
    %v338 = vmul.f32 %v330, %v336
    %v339 = vlaneseq
    %v340 = vand.u32 %v339, 127
    %vm341 = vcmp.lt.s32.totalorder %v340, 64
    %v342 = vsel %vm341, %v338, 0.0
    %343 = vadd.xlane.f32.xlu0 %v342
    %v344 = vpop.xlane.xlu0 %343
    %vm345 = vcmp.ge.s32.totalorder %v340, 64
    %v346 = vsel %vm345, %v338, 0.0
    %347 = vadd.xlane.f32.xlu0 %v346
    %v348 = vpop.xlane.xlu0 %347
    %vm349 = vcmp.eq.s32.totalorder %v340, 0
    %s350 = sld [smem:[#allocation10]]
    %v351 = vstv %s350
    %v352 = vadd.f32 %v344, %v351
    %s353 = sld [smem:[#allocation10 + $0x1]]
    %v354 = vstv %s353
    %v355 = vadd.f32 %v348, %v354
    %v356 = vsel %vm349, %v352, %v355
    %vm357 = vcmask 15360
    %358 = vst.msk [vmem:[%s9] sm:$0xff] %vm357, %v356
    // Predicated region
    $region58: #{_twin_q_pallas.1} parent=1 // pred_check
      _
    $region59: #{_twin_q_pallas.1} parent=1 // pred_check_branch
      %360 = sbr.rel (0) target = $region61
    $region60: #{_twin_q_pallas.1} parent=1 // pred_region
      _
    $region61: #{_twin_q_pallas.1} parent=1 // pred_fallthru
      _
    // Predicated region
    $region62: #{_twin_q_pallas.1} parent=1 // pred_check
      _
    $region63: #{_twin_q_pallas.1} parent=1 // pred_check_branch
      %362 = sbr.rel (0) target = $region65
    $region64: #{_twin_q_pallas.1} parent=1 // pred_region
      _
    $region65: #{_twin_q_pallas.1} parent=1 // pred_fallthru
      _
    %363 = vsyncpa [#allocation3], 1
    %364 = vsyncpa [#allocation6], 1
    %365 = vsyncpa [#allocation9], 1
    %366 = vsyncpa [#allocation4], 1

</llo_original>
